<compile_context>
chip_gen: v5e
topology: v5e:2x2
jax: 0.10.0
libtpu: 0.0.40
codegen_flags: <defaults>
</compile_context>

<pallas_src>
import jax
import jax.numpy as jnp
from jax.experimental import pallas as pl
from jax.experimental.pallas import tpu as pltpu

_LANE = 128
_SUBLANE = 8
_MiB = 1024 * 1024


def _round_up(x, m):
    return -(-x // m) * m


def _default_vmem_limit_bytes():
    """Generation-aware scoped-VMEM limit for the W-streaming pipeline."""
    try:
        info = pltpu.get_tpu_info()
        cap = int(getattr(info, "vmem_capacity_bytes", 0) or 0)
    except Exception:
        cap = 0
    if cap >= 100 * _MiB:          # v5e / v6e: 128 MiB physical VMEM
        return 96 * _MiB
    if cap > 0:                    # v7x: 64 MiB per TensorCore
        return max(16 * _MiB, min(44 * _MiB, cap - 20 * _MiB))
    return 48 * _MiB               # unknown generation: conservative


# -----------------------------------------------------------------------------
# Pallas kernel: FFNN projection   out[B, O] = x[B, H] @ W[H, O] + b[1, O]
#   - x arrives pre-cast to the weight dtype (bf16), resident across the grid
#   - W, b are streamed as bf16 tiles over the O axis (HBM-bound kernel)
#   - MXU accumulates in float32; output stays float32
# -----------------------------------------------------------------------------
def _ffnn_kernel(x_ref, w_ref, b_ref, o_ref):
    acc = jnp.dot(x_ref[...], w_ref[...], preferred_element_type=jnp.float32)
    o_ref[...] = acc + b_ref[...].astype(jnp.float32)


def ffnn_pallas(x, w, b, *, tile_n=None,
                weight_dtype=jnp.bfloat16,
                vmem_limit_bytes=None):
    """x: [B, H] float32, w: [H, O], b: [O]  ->  [B, O] float32."""
    B, H = x.shape
    O = w.shape[1]

    if vmem_limit_bytes is None:
        vmem_limit_bytes = _default_vmem_limit_bytes()

    w_itemsize = jnp.dtype(weight_dtype).itemsize
    out_itemsize = jnp.dtype(jnp.float32).itemsize

    # --- pad batch rows to a full sublane group (unmasked vreg stores) -------
    B_pad = max(_SUBLANE, _round_up(B, _SUBLANE))
    x_p = x.astype(weight_dtype)                 # hoisted f32->bf16 cast
    if B_pad != B:
        x_p = jnp.pad(x_p, ((0, B_pad - B), (0, 0)))

    # --- lane-pad the output axis --------------------------------------------
    O_lane = _round_up(O, _LANE)

    # --- explicit VMEM accounting -> lane-dense tile size ---------------------
    headroom = 2 * _MiB
    x_resident = 2 * B_pad * H * w_itemsize      # resident x (double-buffered)
    budget = vmem_limit_bytes - headroom - x_resident
    per_lane_cost = (2 * H * w_itemsize          # double-buffered W columns
                     + 2 * w_itemsize            # double-buffered bias
                     + 2 * B_pad * out_itemsize) # double-buffered output
    tile_cap = max(_LANE, (budget // per_lane_cost) // _LANE * _LANE)

    if tile_n is None:
        tile_n = min(O_lane, tile_cap)
        grid_n = pl.cdiv(O_lane, tile_n)
        # Bias toward an even grid-step count so a 2-TC (v7x) parallel split
        # gives both cores equal O-ranges.
        if grid_n > 1 and grid_n % 2 == 1:
            grid_n += 1
        tile_n = _round_up(pl.cdiv(O_lane, grid_n), _LANE)
        grid_n = pl.cdiv(O_lane, tile_n)
    else:
        tile_n = min(_round_up(max(tile_n, _LANE), _LANE), O_lane)
        grid_n = pl.cdiv(O_lane, tile_n)

    O_pad = grid_n * tile_n

    # --- stream weights/bias as bf16, zero-padded to a whole number of tiles --
    w_c = w.astype(weight_dtype)
    b_c = b.reshape(1, O).astype(weight_dtype)
    if O_pad != O:
        w_c = jnp.pad(w_c, ((0, 0), (0, O_pad - O)))
        b_c = jnp.pad(b_c, ((0, 0), (0, O_pad - O)))

    # parallel split across TensorCores pays off whenever there are >= 2 steps
    dim_sem = ("parallel",) if grid_n >= 2 else ("arbitrary",)

    flops = 2 * B_pad * H * O_pad
    bytes_accessed = (H * O_pad * w_itemsize         # W stream (dominant)
                      + O_pad * w_itemsize           # bias
                      + B_pad * H * w_itemsize       # x
                      + B_pad * O_pad * out_itemsize)  # output

    out = pl.pallas_call(
        _ffnn_kernel,
        out_shape=jax.ShapeDtypeStruct((B_pad, O_pad), jnp.float32),
        grid_spec=pltpu.PrefetchScalarGridSpec(
            num_scalar_prefetch=0,
            grid=(grid_n,),
            in_specs=[
                pl.BlockSpec((B_pad, H), lambda j: (0, 0)),      # x: resident
                pl.BlockSpec((H, tile_n), lambda j: (0, j)),     # W: tile over O
                pl.BlockSpec((1, tile_n), lambda j: (0, j)),     # b: tile over O
            ],
            out_specs=pl.BlockSpec((B_pad, tile_n), lambda j: (0, j)),
        ),
        compiler_params=pltpu.CompilerParams(
            dimension_semantics=dim_sem,
            vmem_limit_bytes=vmem_limit_bytes,
        ),
        cost_estimate=pl.CostEstimate(
            flops=flops, transcendentals=0, bytes_accessed=bytes_accessed),
    )(x_p, w_c, b_c)

    return out[:B, :O]


# -----------------------------------------------------------------------------
# get_prefix equivalent (prefix-variant hot path), built on the Pallas kernel
# -----------------------------------------------------------------------------
def get_prefix(sentence_representation, ffnn_w, ffnn_b, *, num_layers,
               prefix_length, head_num, head_dim,
               use_encoder_prefix=True, use_cross_prefix=True,
               use_decoder_prefix=True):
    B = sentence_representation.shape[0]
    prefix_keys_flat = ffnn_pallas(sentence_representation, ffnn_w, ffnn_b)
    # TODO(synk): keys/values alias the same projection here; verify against
    # the actual GenBEE prefix FFNN (some variants use a 2x-sized projection).
    prefix_values_flat = prefix_keys_flat

    # NOTE: downstream Pallas/XLA prefix-attention consumers should prefer the
    # flat [B, O] layout to stay lane-dense; the 5-D view below matches the
    # torch module's .view() semantics.
    prefix_keys = prefix_keys_flat.reshape(
        B, num_layers, prefix_length, head_num, head_dim)
    prefix_values = prefix_values_flat.reshape(
        B, num_layers, prefix_length, head_num, head_dim)

    prefix = {}
    if use_encoder_prefix:
        prefix['encoder_prefix'] = (prefix_keys, prefix_values)
    if use_cross_prefix:
        prefix['cross_prefix'] = (prefix_keys, prefix_values)
    if use_decoder_prefix:
        prefix['decoder_prefix'] = (prefix_keys, prefix_values)
    return prefix


# -----------------------------------------------------------------------------
# process_data label construction (plain JAX glue: integer concat / masking)
# -----------------------------------------------------------------------------
def build_labels(dec_idxs, dec_attn, pad_token_id):
    """Mirror of the raw_lbl_idxs / lbl_idxs construction in process_data."""
    B = dec_idxs.shape[0]
    pad_col = jnp.full((B, 1), pad_token_id, dtype=dec_idxs.dtype)
    raw_lbl_idxs = jnp.concatenate([dec_idxs[:, 1:], pad_col], axis=1)
    lbl_attn = jnp.concatenate(
        [dec_attn[:, 1:], jnp.zeros((B, 1), dtype=dec_attn.dtype)], axis=1)
    lbl_idxs = jnp.where(lbl_attn == 0, jnp.int32(-100), raw_lbl_idxs)
    return raw_lbl_idxs, lbl_idxs


if __name__ == "__main__":
    # Small, consistent synthetic shapes
    B = 2                 # batch of event types
    H = 32                # encoder hidden size (stand-in)
    num_layers = 2
    prefix_length = 8
    head_num = 4
    head_dim = 8
    O = num_layers * prefix_length * head_num * head_dim   # 512

    key = jax.random.PRNGKey(0)
    k_rep, k_w, k_b, k_w2, k_b2, k_dec = jax.random.split(key, 6)

    # Stand-in for the encoder CLS representation
    sentence_representation = jax.random.normal(k_rep, (B, H), dtype=jnp.float32)

    # Deterministic FFNN parameters: Linear(H -> num_layers*prefix_len*heads*dim)
    ffnn_w = jax.random.normal(k_w, (H, O), dtype=jnp.float32) * (1.0 / jnp.sqrt(H))
    ffnn_b = jax.random.normal(k_b, (O,), dtype=jnp.float32) * 0.01

    # Main path: auto tile -> single block (weights are only 32 KB in bf16)
    prefix = get_prefix(
        sentence_representation, ffnn_w, ffnn_b,
        num_layers=num_layers, prefix_length=prefix_length,
        head_num=head_num, head_dim=head_dim)

    # Secondary sanity run: force a multi-step O-grid to exercise the tiled
    # (W-streaming, "parallel") pipeline path used at production sizes.
    tiled_flat = ffnn_pallas(sentence_representation, ffnn_w, ffnn_b, tile_n=128)

    # Third sanity run: awkward O (not a lane multiple) exercises the O-padding
    # path (no full-extent fallback, no tile collapse).
    O_awk = 200
    ffnn_w2 = jax.random.normal(k_w2, (H, O_awk), dtype=jnp.float32) * (1.0 / jnp.sqrt(H))
    ffnn_b2 = jax.random.normal(k_b2, (O_awk,), dtype=jnp.float32) * 0.01
    awk_flat = ffnn_pallas(sentence_representation, ffnn_w2, ffnn_b2)

    # Label-building glue (deterministic synthetic decoder ids / attention)
    seq = 8
    dec_idxs = jax.random.randint(k_dec, (B, seq), 0, 100, dtype=jnp.int32)
    dec_attn = jnp.ones((B, seq), dtype=jnp.int32)
    raw_lbl_idxs, lbl_idxs = build_labels(dec_idxs, dec_attn, pad_token_id=1)

    # Block on results
    pk, pv = prefix['encoder_prefix']
    jax.block_until_ready(pk)
    jax.block_until_ready(pv)
    jax.block_until_ready(tiled_flat)
    jax.block_until_ready(awk_flat)
    jax.block_until_ready(lbl_idxs)

    # Correctness check against a plain-JAX reference of the bf16-weight FFNN
    x_ref = sentence_representation.astype(jnp.bfloat16).astype(jnp.float32)
    w_ref = ffnn_w.astype(jnp.bfloat16).astype(jnp.float32)
    b_ref = ffnn_b.astype(jnp.bfloat16).astype(jnp.float32)
    ref_flat = x_ref @ w_ref + b_ref
    ref = ref_flat.reshape(B, num_layers, prefix_length, head_num, head_dim)

    w2_ref = ffnn_w2.astype(jnp.bfloat16).astype(jnp.float32)
    b2_ref = ffnn_b2.astype(jnp.bfloat16).astype(jnp.float32)
    ref_awk = x_ref @ w2_ref + b2_ref

    assert pk.shape == (B, num_layers, prefix_length, head_num, head_dim)
    assert jnp.allclose(pk, ref, atol=1e-3, rtol=1e-3)
    assert jnp.allclose(pv, ref, atol=1e-3, rtol=1e-3)
    assert tiled_flat.shape == (B, O)
    assert jnp.allclose(tiled_flat, ref_flat, atol=1e-3, rtol=1e-3)
    assert awk_flat.shape == (B, O_awk)
    assert jnp.allclose(awk_flat, ref_awk, atol=1e-3, rtol=1e-3)
    assert raw_lbl_idxs.shape == (B, seq) and lbl_idxs.shape == (B, seq)

    print("KERNEL_OK")
</pallas_src>

<mosaic_0001>
module attributes {stable_mosaic.version = 11 : i64} {
  func.func @_ffnn_kernel(%arg0: i32, %arg1: memref<8x32xbf16, #tpu.memory_space<vmem>>, %arg2: memref<32x512xbf16, #tpu.memory_space<vmem>>, %arg3: memref<1x512xbf16, #tpu.memory_space<vmem>>, %arg4: memref<8x512xf32, #tpu.memory_space<vmem>>) attributes {dimension_semantics = [#tpu.dimension_semantics<arbitrary>], iteration_bounds = array<i64: 1>, scalar_prefetch = 0 : i64, scratch_operands = 0 : i64, tpu.core_type = #tpu.core_type<tc>, window_params = [{pipeline_mode = #tpu.pipeline_mode<synchronous>, transform_indices = @transform_0, window_bounds = array<i64: 8, 32>}, {transform_indices = @transform_1, window_bounds = array<i64: 32, 512>}, {transform_indices = @transform_2, window_bounds = array<i64: 1, 512>}, {transform_indices = @transform_3, window_bounds = array<i64: 8, 512>}]} {
    %c0 = arith.constant 0 : index
    %c0_0 = arith.constant 0 : index
    %0 = vector.load %arg1[%c0, %c0_0] : memref<8x32xbf16, #tpu.memory_space<vmem>>, vector<8x32xbf16>
    %c0_1 = arith.constant 0 : index
    %c0_2 = arith.constant 0 : index
    %1 = vector.load %arg2[%c0_1, %c0_2] : memref<32x512xbf16, #tpu.memory_space<vmem>>, vector<32x512xbf16>
    %cst = arith.constant dense<0.000000e+00> : vector<8x512xf32>
    %2 = tpu.matmul %0, %1, %cst {dimension_numbers = #tpu.dot_dimension_numbers<[1], [0], [0], [1], [0, 0, 1, 1], [], []>} : vector<8x32xbf16>, vector<32x512xbf16>, vector<8x512xf32> -> vector<8x512xf32>
    %c0_3 = arith.constant 0 : index
    %c0_4 = arith.constant 0 : index
    %3 = vector.load %arg3[%c0_3, %c0_4] : memref<1x512xbf16, #tpu.memory_space<vmem>>, vector<1x512xbf16>
    %4 = arith.extf %3 : vector<1x512xbf16> to vector<1x512xf32>
    %5 = vector.broadcast %4 : vector<1x512xf32> to vector<8x512xf32>
    %6 = arith.addf %2, %5 : vector<8x512xf32>
    %c0_5 = arith.constant 0 : index
    %c0_6 = arith.constant 0 : index
    %7 = vector.load %arg4[%c0_5, %c0_6] : memref<8x512xf32, #tpu.memory_space<vmem>>, vector<8x512xf32>
    tpu.vector_store %arg4[%c0_5, %c0_6], %6 {strides = array<i32>} : memref<8x512xf32, #tpu.memory_space<vmem>>, vector<8x512xf32>,
    return
  }
  func.func @transform_0(%arg0: i32) -> (i32, i32) {
    %c0_i32 = arith.constant 0 : i32
    %c0_i32_0 = arith.constant 0 : i32
    %c0_i32_1 = arith.constant 0 : i32
    return %c0_i32, %c0_i32_0 : i32, i32
  }
  func.func @transform_1(%arg0: i32) -> (i32, i32) {
    %c0_i32 = arith.constant 0 : i32
    %c0_i32_0 = arith.constant 0 : i32
    return %c0_i32, %arg0 : i32, i32
  }
  func.func @transform_2(%arg0: i32) -> (i32, i32) {
    %c0_i32 = arith.constant 0 : i32
    %c0_i32_0 = arith.constant 0 : i32
    return %c0_i32, %arg0 : i32, i32
  }
  func.func @transform_3(%arg0: i32) -> (i32, i32) {
    %c0_i32 = arith.constant 0 : i32
    %c0_i32_0 = arith.constant 0 : i32
    return %c0_i32, %arg0 : i32, i32
  }
}

</mosaic_0001>

<llo_original>
// kernel: tpu_custom_call.1
$region0: #{tpu_custom_call.1}
  #allocation0 [shape = 'u32[]', space=smem, size = 0x4, offset = 0x4, fixed_abs, tag = 'smem constant byte address 0x4 - core index']
  #allocation1 [shape = 'u32[72,128]{1,0:T(1,128)}', space=vmem, size = 0x9000, scoped, tag = 'internal scratch']
  %s0 = inlined_call_operand.hbm [shape: bf16[8,32], index: 0, kind: input, shape index: {}]
  %s1 = inlined_call_operand.hbm [shape: bf16[32,512], index: 1, kind: input, shape index: {}]
  %s2 = inlined_call_operand.hbm [shape: bf16[1,512], index: 2, kind: input, shape index: {}]
  %s3 = inlined_call_operand.hbm [shape: f32[8,512], index: 3, kind: output, shape index: {}]
  %s4 = sld [smem:[#allocation0]]
  $region34: #{tpu_custom_call.1} parent=0
    _
  %s6 = ssub.s32 1, %s4
  %s7 = scalar_select 0, %s6, %s4
  $region1: #{tpu_custom_call.1} parent=0
    #allocation2 [shape = 'u8[2048]{0}', space=vmem, size = 0x800, scoped, tag = 'input window, operand 0, single buffered']
    #allocation3 [shape = 's32[1]{0}', space=sflag, size = 0x4, scoped, tag = 'scoped memory for tpu_custom_call.1']
    #allocation4 [shape = 's32[1]{0}', space=sflag, size = 0x4, scoped, tag = 'scoped memory for tpu_custom_call.1']
    #allocation5 [shape = 'u8[32768]{0}', space=vmem, size = 0x8000, scoped, tag = 'input window, operand 1, single buffered']
    #allocation6 [shape = 's32[1]{0}', space=sflag, size = 0x4, scoped, tag = 'scoped memory for tpu_custom_call.1']
    #allocation7 [shape = 'u8[2048]{0}', space=vmem, size = 0x800, scoped, tag = 'input window, operand 2, single buffered']
    #allocation8 [shape = 'u8[16384]{0}', space=vmem, size = 0x4000, scoped, tag = 'output window, operand 0, single buffered']
    %8 = vsyncpa [#allocation3], 0
    %9 = vsyncpa [#allocation6], 0
    %10 = vsyncpa [#allocation4], 0
    // Predicated region
    $region2: #{tpu_custom_call.1} parent=1 // pred_check
      _
    $region3: #{tpu_custom_call.1} parent=1 // pred_check_branch
      %12 = sbr.rel (0) target = $region5
    $region4: #{tpu_custom_call.1} parent=1 // pred_region
      %14 = vsyncadd [#allocation3], 0
      %s16 = sshll.u32 %s0, 4
      %s17 = int_to_ptr.hbm [resolvable:$true] %s16
      %s18 = sshll.u32 [#allocation2], 4
      %s19 = int_to_ptr.vmem [resolvable:$true] %s18
      %21 = dma.hbm_to_vmem [thread:$0]  %s17, 64, %s19, [#allocation3]
    $region5: #{tpu_custom_call.1} parent=1 // pred_fallthru
      _
    // Predicated region
    $region6: #{tpu_custom_call.1} parent=1 // pred_check
      _
    $region7: #{tpu_custom_call.1} parent=1 // pred_check_branch
      %23 = sbr.rel (0) target = $region9
    $region8: #{tpu_custom_call.1} parent=1 // pred_region
      %25 = vsyncadd [#allocation6], 0
      %s26 = sshll.u32 %s1, 4
      %s27 = int_to_ptr.hbm [resolvable:$true] %s26
      %s28 = sshll.u32 [#allocation5], 4
      %s29 = int_to_ptr.vmem [resolvable:$true] %s28
      %34 = dma.hbm_to_vmem [thread:$0]  %s27, 1024, %s29, [#allocation6], 256, 256, 16
    $region9: #{tpu_custom_call.1} parent=1 // pred_fallthru
      _
    // Predicated region
    $region10: #{tpu_custom_call.1} parent=1 // pred_check
      _
    $region11: #{tpu_custom_call.1} parent=1 // pred_check_branch
      %36 = sbr.rel (0) target = $region13
    $region12: #{tpu_custom_call.1} parent=1 // pred_region
      %38 = vsyncadd [#allocation6], 0
      %s40 = sshll.u32 %s2, 4
      %s41 = int_to_ptr.hbm [resolvable:$true] %s40
      %s42 = sshll.u32 [#allocation7], 4
      %s43 = int_to_ptr.vmem [resolvable:$true] %s42
      %45 = dma.hbm_to_vmem [thread:$0]  %s41, 64, %s43, [#allocation6]
    $region13: #{tpu_custom_call.1} parent=1 // pred_fallthru
      _
    // Predicated region
    $region14: #{tpu_custom_call.1} parent=1 // pred_check
      _
    $region15: #{tpu_custom_call.1} parent=1 // pred_check_branch
      %47 = sbr.rel (0) target = $region17
    $region16: #{tpu_custom_call.1} parent=1 // pred_region
      %49 = dma.done [#allocation3], 64
    $region17: #{tpu_custom_call.1} parent=1 // pred_fallthru
      _
    // Predicated region
    $region18: #{tpu_custom_call.1} parent=1 // pred_check
      _
    $region19: #{tpu_custom_call.1} parent=1 // pred_check_branch
      %51 = sbr.rel (0) target = $region21
    $region20: #{tpu_custom_call.1} parent=1 // pred_region
      %53 = dma.done [#allocation6], 1024
    $region21: #{tpu_custom_call.1} parent=1 // pred_fallthru
      _
    // Predicated region
    $region22: #{tpu_custom_call.1} parent=1 // pred_check
      _
    $region23: #{tpu_custom_call.1} parent=1 // pred_check_branch
      %55 = sbr.rel (0) target = $region25
    $region24: #{tpu_custom_call.1} parent=1 // pred_region
      %57 = dma.done [#allocation6], 64
    $region25: #{tpu_custom_call.1} parent=1 // pred_fallthru
      _
    %v59 = vld [vmem:[#allocation2] sm:$0xf]
    %v60 = vld [vmem:[#allocation5] sm:$0xff]
    %v61 = vld [vmem:[#allocation5 + $0x8] sm:$0xff]
    %v62 = vld [vmem:[#allocation5 + $0x10] sm:$0xff]
    %v63 = vld [vmem:[#allocation5 + $0x18] sm:$0xff]
    %v64 = vld [vmem:[#allocation5 + $0x20] sm:$0xff]
    %v65 = vld [vmem:[#allocation5 + $0x28] sm:$0xff]
    %v66 = vld [vmem:[#allocation5 + $0x30] sm:$0xff]
    %v67 = vld [vmem:[#allocation5 + $0x38] sm:$0xff]
    %v68 = vld [vmem:[#allocation7] sm:$0xf]
    %v69 = vunpack.c.l.bf16 %v68
    %v71 = vperm.slane %v69, 0
    %v72 = vperm.slane %v69, 2
    %v73 = vperm.slane %v69, 4
    %v74 = vperm.slane %v69, 6
    %v79 = vperm.slane %v71, 0
    %v80 = vperm.slane %v72, 0
    %v81 = vperm.slane %v73, 0
    %v82 = vperm.slane %v74, 0
    %v91 = vunpack.c.l.b16 %v60
    %v92 = vunpack.c.h.b16 %v60
    %v93 = vunpack.c.l.b16 %v61
    %v94 = vunpack.c.h.b16 %v61
    %v95 = vunpack.c.l.b16 %v62
    %v96 = vunpack.c.h.b16 %v62
    %v97 = vunpack.c.l.b16 %v63
    %v98 = vunpack.c.h.b16 %v63
    %v99 = vunpack.c.l.b16 %v64
    %v100 = vunpack.c.h.b16 %v64
    %v101 = vunpack.c.l.b16 %v65
    %v102 = vunpack.c.h.b16 %v65
    %v103 = vunpack.c.l.b16 %v66
    %v104 = vunpack.c.h.b16 %v66
    %v105 = vunpack.c.l.b16 %v67
    %v106 = vunpack.c.h.b16 %v67
    %v107 = vpack.c.b16 %v95, %v91
    %v108 = vpack.c.b16 %v96, %v92
    %v109 = vpack.c.b16 %v97, %v93
    %v110 = vpack.c.b16 %v98, %v94
    %v111 = vpack.c.b16 %v103, %v99
    %v112 = vpack.c.b16 %v104, %v100
    %v113 = vpack.c.b16 %v105, %v101
    %v114 = vpack.c.b16 %v106, %v102
    %vm123 = vcmask 261120
    %v125 = vsel %vm123, %v59, 0
    %127 = vmatpush.bf16.msra.mxu0 0
    %128 = vmatpush.bf16.msra.mxu0 0
    %129 = vmatpush.bf16.msra.mxu0 0
    %130 = vmatpush.bf16.msra.mxu0 0
    %131 = vmatpush.bf16.msra.mxu0 0
    %132 = vmatpush.bf16.msra.mxu0 0
    %133 = vmatpush.bf16.msra.mxu0 %v111
    %134 = vmatpush.bf16.msra.mxu0 %v107
    %135 = vmatmul.bf16.gmra.mxu0 %v125
    %v136 = vpop.f32.mrf.mxu0
    %v137 = vadd.f32 %v79, %v136
    %v138 = vpop.f32.mrf.mxu0
    %139 = vdwg.mxu0
    %140 = vmatpush.bf16.msra.mxu0 0
    %141 = vmatpush.bf16.msra.mxu0 0
    %142 = vmatpush.bf16.msra.mxu0 0
    %143 = vmatpush.bf16.msra.mxu0 0
    %144 = vmatpush.bf16.msra.mxu0 0
    %145 = vmatpush.bf16.msra.mxu0 0
    %146 = vmatpush.bf16.msra.mxu0 %v112
    %147 = vmatpush.bf16.msra.mxu0 %v108
    %148 = vmatmul.bf16.gmra.mxu0 %v125
    %v149 = vpop.f32.mrf.mxu0
    %v150 = vadd.f32 %v80, %v149
    %v151 = vpop.f32.mrf.mxu0
    %152 = vdwg.mxu0
    %153 = vmatpush.bf16.msra.mxu0 0
    %154 = vmatpush.bf16.msra.mxu0 0
    %155 = vmatpush.bf16.msra.mxu0 0
    %156 = vmatpush.bf16.msra.mxu0 0
    %157 = vmatpush.bf16.msra.mxu0 0
    %158 = vmatpush.bf16.msra.mxu0 0
    %159 = vmatpush.bf16.msra.mxu0 %v113
    %160 = vmatpush.bf16.msra.mxu0 %v109
    %161 = vmatmul.bf16.gmra.mxu0 %v125
    %v162 = vpop.f32.mrf.mxu0
    %v163 = vadd.f32 %v81, %v162
    %v164 = vpop.f32.mrf.mxu0
    %165 = vdwg.mxu0
    %166 = vmatpush.bf16.msra.mxu0 0
    %167 = vmatpush.bf16.msra.mxu0 0
    %168 = vmatpush.bf16.msra.mxu0 0
    %169 = vmatpush.bf16.msra.mxu0 0
    %170 = vmatpush.bf16.msra.mxu0 0
    %171 = vmatpush.bf16.msra.mxu0 0
    %172 = vmatpush.bf16.msra.mxu0 %v114
    %173 = vmatpush.bf16.msra.mxu0 %v110
    %174 = vmatmul.bf16.gmra.mxu0 %v125
    %v175 = vpop.f32.mrf.mxu0
    %v176 = vadd.f32 %v82, %v175
    %v177 = vpop.f32.mrf.mxu0
    %178 = vdwg.mxu0
    %179 = vst [vmem:[#allocation8] sm:$0xff] %v137
    %180 = vst [vmem:[#allocation8 + $0x8] sm:$0xff] %v150
    %181 = vst [vmem:[#allocation8 + $0x10] sm:$0xff] %v163
    %182 = vst [vmem:[#allocation8 + $0x18] sm:$0xff] %v176
    // Predicated region
    $region26: #{tpu_custom_call.1} parent=1 // pred_check
      _
    $region27: #{tpu_custom_call.1} parent=1 // pred_check_branch
      %184 = sbr.rel (0) target = $region29
    $region28: #{tpu_custom_call.1} parent=1 // pred_region
      %186 = vsyncadd [#allocation4], 0
      %s188 = sshll.u32 [#allocation8], 4
      %s189 = int_to_ptr.vmem [resolvable:$true] %s188
      %s190 = sshll.u32 %s3, 4
      %s191 = int_to_ptr.hbm [resolvable:$true] %s190
      %193 = dma.vmem_to_hbm [thread:$0]  %s189, 512, %s191, [#allocation4]
    $region29: #{tpu_custom_call.1} parent=1 // pred_fallthru
      _
    // Predicated region
    $region30: #{tpu_custom_call.1} parent=1 // pred_check
      _
    $region31: #{tpu_custom_call.1} parent=1 // pred_check_branch
      %195 = sbr.rel (0) target = $region33
    $region32: #{tpu_custom_call.1} parent=1 // pred_region
      %197 = dma.done [#allocation4], 512
    $region33: #{tpu_custom_call.1} parent=1 // pred_fallthru
      _
    %198 = vsyncpa [#allocation3], 1
    %199 = vsyncpa [#allocation6], 1
    %200 = vsyncpa [#allocation4], 1

</llo_original>
